<compile_context>
chip_gen: v5e
topology: v5e:2x2
jax: 0.10.0
libtpu: 0.0.40
codegen_flags: <defaults>
</compile_context>

<pallas_src>
import functools
import math

import jax
import jax.numpy as jnp
from jax.experimental import pallas as pl
from jax.experimental.pallas import tpu as pltpu

LN_EPS = 1e-5  # PyTorch nn.LayerNorm default


def _patch_embed_kernel(p_ref, w_ref, b_ref, g_ref, beta_ref, o_ref):
    # p_ref:    [TM, D]   patches tile (compute dtype, e.g. bf16)
    # w_ref:    [D, E]    projection weight (compute dtype)
    # b_ref:    [1, E]    conv bias   (f32)
    # g_ref:    [1, E]    LN weight   (f32)
    # beta_ref: [1, E]    LN bias     (f32)
    # o_ref:    [E, TM]   lane-dense output tile (TM multiple of 128)
    y = jnp.dot(p_ref[...], w_ref[...], preferred_element_type=jnp.float32)
    y = y + b_ref[...]

    # Single-pass LayerNorm statistics over the embed_dim axis (E, un-tiled).
    inv_e = jnp.float32(1.0 / y.shape[-1])
    s1 = jnp.sum(y, axis=-1, keepdims=True)
    s2 = jnp.sum(y * y, axis=-1, keepdims=True)
    mean = s1 * inv_e
    var = jnp.maximum(s2 * inv_e - mean * mean, 0.0)
    y_hat = (y - mean) * jax.lax.rsqrt(var + LN_EPS)
    out = y_hat * g_ref[...] + beta_ref[...]

    # Transpose [TM, E] -> [E, TM] so the store is lane-dense (last dim = TM).
    o_ref[...] = out.T.astype(o_ref.dtype)


def _round_up(a, b):
    return pl.cdiv(a, b) * b


@functools.partial(jax.jit, static_argnames=("patch_size", "stride", "compute_dtype"))
def overlap_patch_embed(x_nchw, conv_w, conv_b, ln_w, ln_b, *,
                        patch_size, stride, compute_dtype=jnp.bfloat16):
    """Forward pass of OverlapPatchEmbed.

    x_nchw : [N, Cin, H, W]
    conv_w : [E, Cin, kh, kw]   (PyTorch Conv2d layout)
    conv_b : [E]
    ln_w   : [E]
    ln_b   : [E]
    returns: [N, E, Ho, Wo]  (NCHW, matching the PyTorch module)
    """
    N, Cin, H, W = x_nchw.shape
    E = conv_w.shape[0]
    kh, kw = patch_size, patch_size
    Ho = (H - kh) // stride + 1
    Wo = (W - kw) // stride + 1

    # ---- im2col (JAX glue): [M, D] with rows ordered (n, ho, wo), D = (Cin, kh, kw) ----
    slices = []
    for i in range(kh):
        for j in range(kw):
            slices.append(x_nchw[:, :, i: i + stride * Ho: stride,
                                       j: j + stride * Wo: stride])  # [N, Cin, Ho, Wo]
    patches = jnp.stack(slices, axis=2)                               # [N, Cin, kh*kw, Ho, Wo]
    patches = jnp.transpose(patches, (0, 3, 4, 1, 2)).reshape(N * Ho * Wo, Cin * kh * kw)

    # Weight: [E, Cin, kh, kw] -> [D, E], same (Cin, kh, kw) flatten order.
    w_mat = conv_w.reshape(E, Cin * kh * kw).T

    M, D = patches.shape

    # ---- M-axis tiling: TM multiple of 128, capped for VMEM (safe on v5e/v6e/v7x) ----
    TM = min(1024, _round_up(M, 128))
    Mp = _round_up(M, TM)
    if Mp != M:
        patches = jnp.pad(patches, ((0, Mp - M), (0, 0)))  # pad rows are discarded later
    grid = Mp // TM

    # Streamed operands in bf16 (MXU-native, half the HBM read traffic); params stay f32.
    patches_c = patches.astype(compute_dtype)
    w_c = w_mat.astype(compute_dtype)
    b_row = conv_b.reshape(1, E).astype(jnp.float32)
    g_row = ln_w.reshape(1, E).astype(jnp.float32)
    beta_row = ln_b.reshape(1, E).astype(jnp.float32)

    out_flat = pl.pallas_call(
        _patch_embed_kernel,
        out_shape=jax.ShapeDtypeStruct((E, Mp), x_nchw.dtype),
        grid=(grid,),
        in_specs=[
            pl.BlockSpec((TM, D), lambda i: (i, 0)),   # patches: streamed per tile
            pl.BlockSpec((D, E), lambda i: (0, 0)),    # weight: resident
            pl.BlockSpec((1, E), lambda i: (0, 0)),    # conv bias
            pl.BlockSpec((1, E), lambda i: (0, 0)),    # LN gamma
            pl.BlockSpec((1, E), lambda i: (0, 0)),    # LN beta
        ],
        out_specs=pl.BlockSpec((E, TM), lambda i: (0, i)),  # lane-dense [E, TM] blocks
        compiler_params=pltpu.CompilerParams(
            dimension_semantics=("parallel",),
            vmem_limit_bytes=32 * 1024 * 1024,
        ),
    )(patches_c, w_c, b_row, g_row, beta_row)

    # [E, Mp] -> drop pad cols -> [E, N, Ho, Wo] -> NCHW [N, E, Ho, Wo]
    out = out_flat[:, :M].reshape(E, N, Ho, Wo)
    return jnp.transpose(out, (1, 0, 2, 3))


def _reference(x_nchw, conv_w, conv_b, ln_w, ln_b, *, patch_size, stride):
    """Plain-JAX reference mirroring the PyTorch forward exactly (all f32)."""
    y = jax.lax.conv_general_dilated(
        x_nchw, conv_w, window_strides=(stride, stride), padding="VALID",
        dimension_numbers=("NCHW", "OIHW", "NCHW"))
    y = y + conv_b[None, :, None, None]
    y = jnp.transpose(y, (0, 2, 3, 1))
    mean = jnp.mean(y, axis=-1, keepdims=True)
    var = jnp.mean(jnp.square(y - mean), axis=-1, keepdims=True)
    y = (y - mean) * jax.lax.rsqrt(var + LN_EPS) * ln_w + ln_b
    return jnp.transpose(y, (0, 3, 1, 2))


if __name__ == "__main__":
    # Small shapes consistent with the module.
    N, Cin, H, W = 2, 4, 16, 16
    patch_size, stride, embed_dim = 3, 2, 32

    key = jax.random.PRNGKey(0)
    kx, kw_key, kb_key, kg_key, kbeta_key = jax.random.split(key, 5)

    x = jax.random.normal(kx, (N, Cin, H, W), dtype=jnp.float32)

    # Conv2d init mirroring _init_weights (weight ~ N(0, sqrt(2/fan_out))); use
    # non-trivial bias / LN params to exercise the broadcasts.
    fan_out = patch_size * patch_size * embed_dim
    conv_w = jax.random.normal(kw_key, (embed_dim, Cin, patch_size, patch_size),
                               dtype=jnp.float32) * math.sqrt(2.0 / fan_out)
    conv_b = 0.1 * jax.random.normal(kb_key, (embed_dim,), dtype=jnp.float32)
    ln_w = 1.0 + 0.1 * jax.random.normal(kg_key, (embed_dim,), dtype=jnp.float32)
    ln_b = 0.1 * jax.random.normal(kbeta_key, (embed_dim,), dtype=jnp.float32)

    ref = _reference(x, conv_w, conv_b, ln_w, ln_b,
                     patch_size=patch_size, stride=stride)

    # Performance path: bf16 streamed operands.
    out_bf16 = overlap_patch_embed(x, conv_w, conv_b, ln_w, ln_b,
                                   patch_size=patch_size, stride=stride,
                                   compute_dtype=jnp.bfloat16)
    out_bf16 = jax.block_until_ready(out_bf16)
    assert out_bf16.shape == ref.shape, (out_bf16.shape, ref.shape)
    err_bf16 = float(jnp.max(jnp.abs(out_bf16 - ref)))
    assert err_bf16 < 6e-2, err_bf16

    # Full-precision path: tight check against the reference.
    out_f32 = overlap_patch_embed(x, conv_w, conv_b, ln_w, ln_b,
                                  patch_size=patch_size, stride=stride,
                                  compute_dtype=jnp.float32)
    out_f32 = jax.block_until_ready(out_f32)
    err_f32 = float(jnp.max(jnp.abs(out_f32 - ref)))
    assert err_f32 < 1e-3, err_f32

    print("KERNEL_OK")
</pallas_src>

<mosaic_0001>
module attributes {stable_mosaic.version = 11 : i64} {
  func.func @_patch_embed_kernel(%arg0: i32, %arg1: memref<128x36xbf16, #tpu.memory_space<vmem>>, %arg2: memref<36x32xbf16, #tpu.memory_space<vmem>>, %arg3: memref<1x32xf32, #tpu.memory_space<vmem>>, %arg4: memref<1x32xf32, #tpu.memory_space<vmem>>, %arg5: memref<1x32xf32, #tpu.memory_space<vmem>>, %arg6: memref<32x128xf32, #tpu.memory_space<vmem>>) attributes {dimension_semantics = [#tpu.dimension_semantics<parallel>], iteration_bounds = array<i64: 1>, scalar_prefetch = 0 : i64, scratch_operands = 0 : i64, tpu.core_type = #tpu.core_type<tc>, window_params = [{transform_indices = @transform_0, window_bounds = array<i64: 128, 36>}, {pipeline_mode = #tpu.pipeline_mode<synchronous>, transform_indices = @transform_1, window_bounds = array<i64: 36, 32>}, {pipeline_mode = #tpu.pipeline_mode<synchronous>, transform_indices = @transform_2, window_bounds = array<i64: 1, 32>}, {pipeline_mode = #tpu.pipeline_mode<synchronous>, transform_indices = @transform_3, window_bounds = array<i64: 1, 32>}, {pipeline_mode = #tpu.pipeline_mode<synchronous>, transform_indices = @transform_4, window_bounds = array<i64: 1, 32>}, {transform_indices = @transform_5, window_bounds = array<i64: 32, 128>}]} {
    %c0 = arith.constant 0 : index
    %c0_0 = arith.constant 0 : index
    %0 = vector.load %arg1[%c0, %c0_0] : memref<128x36xbf16, #tpu.memory_space<vmem>>, vector<128x36xbf16>
    %c0_1 = arith.constant 0 : index
    %c0_2 = arith.constant 0 : index
    %1 = vector.load %arg2[%c0_1, %c0_2] : memref<36x32xbf16, #tpu.memory_space<vmem>>, vector<36x32xbf16>
    %cst = arith.constant dense<0.000000e+00> : vector<128x32xf32>
    %2 = tpu.matmul %0, %1, %cst {dimension_numbers = #tpu.dot_dimension_numbers<[1], [0], [0], [1], [0, 0, 1, 1], [], []>} : vector<128x36xbf16>, vector<36x32xbf16>, vector<128x32xf32> -> vector<128x32xf32>
    %c0_3 = arith.constant 0 : index
    %c0_4 = arith.constant 0 : index
    %3 = vector.load %arg3[%c0_3, %c0_4] : memref<1x32xf32, #tpu.memory_space<vmem>>, vector<1x32xf32>
    %4 = vector.broadcast %3 : vector<1x32xf32> to vector<128x32xf32>
    %5 = arith.addf %2, %4 : vector<128x32xf32>
    %cst_5 = arith.constant dense<0.000000e+00> : vector<128xf32>
    %6 = vector.multi_reduction <add>, %5, %cst_5 [1] : vector<128x32xf32> to vector<128xf32>
    %7 = vector.shape_cast %6 : vector<128xf32> to vector<128x1xf32>
    %8 = arith.mulf %5, %5 : vector<128x32xf32>
    %cst_6 = arith.constant dense<0.000000e+00> : vector<128xf32>
    %9 = vector.multi_reduction <add>, %8, %cst_6 [1] : vector<128x32xf32> to vector<128xf32>
    %10 = vector.shape_cast %9 : vector<128xf32> to vector<128x1xf32>
    %cst_7 = arith.constant 3.125000e-02 : f32
    %11 = vector.broadcast %cst_7 : f32 to vector<128x1xf32>
    %12 = arith.mulf %7, %11 : vector<128x1xf32>
    %cst_8 = arith.constant 3.125000e-02 : f32
    %13 = vector.broadcast %cst_8 : f32 to vector<128x1xf32>
    %14 = arith.mulf %10, %13 : vector<128x1xf32>
    %15 = arith.mulf %12, %12 : vector<128x1xf32>
    %16 = arith.subf %14, %15 : vector<128x1xf32>
    %cst_9 = arith.constant 0.000000e+00 : f32
    %17 = vector.broadcast %cst_9 : f32 to vector<128x1xf32>
    %18 = arith.maximumf %16, %17 : vector<128x1xf32>
    %19 = vector.broadcast %12 : vector<128x1xf32> to vector<128x32xf32>
    %20 = arith.subf %5, %19 : vector<128x32xf32>
    %cst_10 = arith.constant 9.99999974E-6 : f32
    %21 = vector.broadcast %cst_10 : f32 to vector<128x1xf32>
    %22 = arith.addf %18, %21 : vector<128x1xf32>
    %23 = math.rsqrt %22 : vector<128x1xf32>
    %24 = vector.broadcast %23 : vector<128x1xf32> to vector<128x32xf32>
    %25 = arith.mulf %20, %24 : vector<128x32xf32>
    %c0_11 = arith.constant 0 : index
    %c0_12 = arith.constant 0 : index
    %26 = vector.load %arg4[%c0_11, %c0_12] : memref<1x32xf32, #tpu.memory_space<vmem>>, vector<1x32xf32>
    %27 = vector.broadcast %26 : vector<1x32xf32> to vector<128x32xf32>
    %28 = arith.mulf %25, %27 : vector<128x32xf32>
    %c0_13 = arith.constant 0 : index
    %c0_14 = arith.constant 0 : index
    %29 = vector.load %arg5[%c0_13, %c0_14] : memref<1x32xf32, #tpu.memory_space<vmem>>, vector<1x32xf32>
    %30 = vector.broadcast %29 : vector<1x32xf32> to vector<128x32xf32>
    %31 = arith.addf %28, %30 : vector<128x32xf32>
    %32 = tpu.transpose %31, [1, 0] : vector<128x32xf32> -> vector<32x128xf32>
    %c0_15 = arith.constant 0 : index
    %c0_16 = arith.constant 0 : index
    %33 = vector.load %arg6[%c0_15, %c0_16] : memref<32x128xf32, #tpu.memory_space<vmem>>, vector<32x128xf32>
    tpu.vector_store %arg6[%c0_15, %c0_16], %32 {strides = array<i32>} : memref<32x128xf32, #tpu.memory_space<vmem>>, vector<32x128xf32>,
    return
  }
  func.func @transform_0(%arg0: i32) -> (i32, i32) {
    %c0_i32 = arith.constant 0 : i32
    %c0_i32_0 = arith.constant 0 : i32
    return %arg0, %c0_i32 : i32, i32
  }
  func.func @transform_1(%arg0: i32) -> (i32, i32) {
    %c0_i32 = arith.constant 0 : i32
    %c0_i32_0 = arith.constant 0 : i32
    %c0_i32_1 = arith.constant 0 : i32
    return %c0_i32, %c0_i32_0 : i32, i32
  }
  func.func @transform_2(%arg0: i32) -> (i32, i32) {
    %c0_i32 = arith.constant 0 : i32
    %c0_i32_0 = arith.constant 0 : i32
    %c0_i32_1 = arith.constant 0 : i32
    return %c0_i32, %c0_i32_0 : i32, i32
  }
  func.func @transform_3(%arg0: i32) -> (i32, i32) {
    %c0_i32 = arith.constant 0 : i32
    %c0_i32_0 = arith.constant 0 : i32
    %c0_i32_1 = arith.constant 0 : i32
    return %c0_i32, %c0_i32_0 : i32, i32
  }
  func.func @transform_4(%arg0: i32) -> (i32, i32) {
    %c0_i32 = arith.constant 0 : i32
    %c0_i32_0 = arith.constant 0 : i32
    %c0_i32_1 = arith.constant 0 : i32
    return %c0_i32, %c0_i32_0 : i32, i32
  }
  func.func @transform_5(%arg0: i32) -> (i32, i32) {
    %c0_i32 = arith.constant 0 : i32
    %c0_i32_0 = arith.constant 0 : i32
    return %c0_i32, %arg0 : i32, i32
  }
}

</mosaic_0001>

<llo_original>
// kernel: overlap_patch_embed.1
$region0: #{overlap_patch_embed.1}
  #allocation0 [shape = 'u32[]', space=smem, size = 0x4, offset = 0x4, fixed_abs, tag = 'smem constant byte address 0x4 - core index']
  #allocation1 [shape = 'u32[72,128]{1,0:T(1,128)}', space=vmem, size = 0x9000, scoped, tag = 'internal scratch']
  %s0 = inlined_call_operand.vmem [shape: bf16[128,36], index: 0, kind: input, shape index: {}]
  %s1 = inlined_call_operand.vmem [shape: bf16[36,32], index: 1, kind: input, shape index: {}]
  %s2 = inlined_call_operand.vmem [shape: f32[1,32], index: 2, kind: input, shape index: {}]
  %s3 = inlined_call_operand.vmem [shape: f32[1,32], index: 3, kind: input, shape index: {}]
  %s4 = inlined_call_operand.vmem [shape: f32[1,32], index: 4, kind: input, shape index: {}]
  %s5 = inlined_call_operand.vmem [shape: f32[32,128], index: 5, kind: output, shape index: {}]
  %s6 = sld [smem:[#allocation0]]
  $region30: #{overlap_patch_embed.1} parent=0
    _
  %s8 = ssub.s32 1, %s6
  %s9 = scalar_select 0, %s8, %s6
  // Predicated region
  $region2: #{overlap_patch_embed.1} parent=0 // pred_check
    _
  $region3: #{overlap_patch_embed.1} parent=0 // pred_check_branch
    %11 = sbr.rel (0) target = $region5
  $region4: #{overlap_patch_embed.1} parent=0 // pred_region
    _
  $region5: #{overlap_patch_embed.1} parent=0 // pred_fallthru
    _
  // Predicated region
  $region6: #{overlap_patch_embed.1} parent=0 // pred_check
    _
  $region7: #{overlap_patch_embed.1} parent=0 // pred_check_branch
    %13 = sbr.rel (0) target = $region9
  $region8: #{overlap_patch_embed.1} parent=0 // pred_region
    _
  $region9: #{overlap_patch_embed.1} parent=0 // pred_fallthru
    _
  // Predicated region
  $region10: #{overlap_patch_embed.1} parent=0 // pred_check
    _
  $region11: #{overlap_patch_embed.1} parent=0 // pred_check_branch
    %15 = sbr.rel (0) target = $region13
  $region12: #{overlap_patch_embed.1} parent=0 // pred_region
    _
  $region13: #{overlap_patch_embed.1} parent=0 // pred_fallthru
    _
  // Predicated region
  $region14: #{overlap_patch_embed.1} parent=0 // pred_check
    _
  $region15: #{overlap_patch_embed.1} parent=0 // pred_check_branch
    %17 = sbr.rel (0) target = $region17
  $region16: #{overlap_patch_embed.1} parent=0 // pred_region
    _
  $region17: #{overlap_patch_embed.1} parent=0 // pred_fallthru
    _
  // Predicated region
  $region18: #{overlap_patch_embed.1} parent=0 // pred_check
    _
  $region19: #{overlap_patch_embed.1} parent=0 // pred_check_branch
    %19 = sbr.rel (0) target = $region21
  $region20: #{overlap_patch_embed.1} parent=0 // pred_region
    _
  $region21: #{overlap_patch_embed.1} parent=0 // pred_fallthru
    _
  %v21 = vld [vmem:[%s0] sm:$0xf]
  %v22 = vld [vmem:[%s0 + $0x4] sm:$0xf]
  %v23 = vld [vmem:[%s0 + $0x8] sm:$0xf]
  %v24 = vld [vmem:[%s0 + $0xc] sm:$0xf]
  %v25 = vld [vmem:[%s0 + $0x10] sm:$0xf]
  %v26 = vld [vmem:[%s0 + $0x14] sm:$0xf]
  %v27 = vld [vmem:[%s0 + $0x18] sm:$0xf]
  %v28 = vld [vmem:[%s0 + $0x1c] sm:$0xf]
  %v29 = vld [vmem:[%s0 + $0x20] sm:$0xf]
  %v30 = vld [vmem:[%s0 + $0x24] sm:$0xf]
  %v31 = vld [vmem:[%s0 + $0x28] sm:$0xf]
  %v32 = vld [vmem:[%s0 + $0x2c] sm:$0xf]
  %v33 = vld [vmem:[%s0 + $0x30] sm:$0xf]
  %v34 = vld [vmem:[%s0 + $0x34] sm:$0xf]
  %v35 = vld [vmem:[%s0 + $0x38] sm:$0xf]
  %v36 = vld [vmem:[%s0 + $0x3c] sm:$0xf]
  %v37 = vld [vmem:[%s1] sm:$0xf]
  %v38 = vld [vmem:[%s1 + $0x4] sm:$0xf]
  %v39 = vld [vmem:[%s1 + $0x8] sm:$0xf]
  %v40 = vld [vmem:[%s1 + $0xc] sm:$0xf]
  %v41 = vld [vmem:[%s1 + $0x10] sm:$0x3]
  %v42 = vld [vmem:[%s2] sm:$0x1]
  %v44 = vperm.slane %v42, 0
  %v62 = vunpack.c.l.b16 %v21
  %v63 = vunpack.c.l.b16 %v22
  %v64 = vunpack.c.l.b16 %v23
  %v65 = vunpack.c.l.b16 %v24
  %v66 = vunpack.c.l.b16 %v25
  %v67 = vunpack.c.l.b16 %v26
  %v68 = vunpack.c.l.b16 %v27
  %v69 = vunpack.c.l.b16 %v28
  %v70 = vunpack.c.l.b16 %v29
  %v71 = vunpack.c.l.b16 %v30
  %v72 = vunpack.c.l.b16 %v31
  %v73 = vunpack.c.l.b16 %v32
  %v74 = vunpack.c.l.b16 %v33
  %v75 = vunpack.c.l.b16 %v34
  %v76 = vunpack.c.l.b16 %v35
  %v77 = vunpack.c.l.b16 %v36
  %v78 = vpack.c.b16 %v63, %v62
  %v79 = vpack.c.b16 %v65, %v64
  %v80 = vpack.c.b16 %v67, %v66
  %v81 = vpack.c.b16 %v69, %v68
  %v82 = vpack.c.b16 %v71, %v70
  %v83 = vpack.c.b16 %v73, %v72
  %v84 = vpack.c.b16 %v75, %v74
  %v85 = vpack.c.b16 %v77, %v76
  %v91 = vunpack.c.l.b16 %v37
  %v92 = vunpack.c.l.b16 %v38
  %v93 = vunpack.c.l.b16 %v39
  %v94 = vunpack.c.l.b16 %v40
  %v95 = vunpack.c.l.b16 %v41
  %v96 = vpack.c.b16 %v92, %v91
  %v97 = vpack.c.b16 %v94, %v93
  %v98 = vpack.c.b16 %v95, %v95
  %vm101 = vcmask 293888
  %v103 = vsel %vm101, %v78, 0
  %v106 = vsel %vm101, %v79, 0
  %v109 = vsel %vm101, %v80, 0
  %v112 = vsel %vm101, %v81, 0
  %v115 = vsel %vm101, %v82, 0
  %v118 = vsel %vm101, %v83, 0
  %v121 = vsel %vm101, %v84, 0
  %v124 = vsel %vm101, %v85, 0
  %vm126 = vcmask 1041408
  %v128 = vsel %vm126, %v98, 0
  %130 = vmatpush.bf16.msra.mxu0 0
  %131 = vmatpush.bf16.msra.mxu0 0
  %132 = vmatpush.bf16.msra.mxu0 0
  %133 = vmatpush.bf16.msra.mxu0 0
  %134 = vmatpush.bf16.msra.mxu0 0
  %135 = vmatpush.bf16.msra.mxu0 %v128
  %136 = vmatpush.bf16.msra.mxu0 %v97
  %137 = vmatpush.bf16.msra.mxu0 %v96
  %138 = vmatmul.bf16.gmra.mxu0 %v103
  %v139 = vpop.f32.mrf.mxu0
  %v140 = vadd.f32 %v44, %v139
  %v141 = vpop.f32.mrf.mxu0
  %v142 = vadd.f32 %v44, %v141
  %143 = vmatmul.bf16.gmra.mxu0 %v106
  %v144 = vpop.f32.mrf.mxu0
  %v145 = vadd.f32 %v44, %v144
  %v146 = vpop.f32.mrf.mxu0
  %v147 = vadd.f32 %v44, %v146
  %148 = vmatmul.bf16.gmra.mxu0 %v109
  %v149 = vpop.f32.mrf.mxu0
  %v150 = vadd.f32 %v44, %v149
  %v151 = vpop.f32.mrf.mxu0
  %v152 = vadd.f32 %v44, %v151
  %153 = vmatmul.bf16.gmra.mxu0 %v112
  %v154 = vpop.f32.mrf.mxu0
  %v155 = vadd.f32 %v44, %v154
  %v156 = vpop.f32.mrf.mxu0
  %v157 = vadd.f32 %v44, %v156
  %158 = vmatmul.bf16.gmra.mxu0 %v115
  %v159 = vpop.f32.mrf.mxu0
  %v160 = vadd.f32 %v44, %v159
  %v161 = vpop.f32.mrf.mxu0
  %v162 = vadd.f32 %v44, %v161
  %163 = vmatmul.bf16.gmra.mxu0 %v118
  %v164 = vpop.f32.mrf.mxu0
  %v165 = vadd.f32 %v44, %v164
  %v166 = vpop.f32.mrf.mxu0
  %v167 = vadd.f32 %v44, %v166
  %168 = vmatmul.bf16.gmra.mxu0 %v121
  %v169 = vpop.f32.mrf.mxu0
  %v170 = vadd.f32 %v44, %v169
  %v171 = vpop.f32.mrf.mxu0
  %v172 = vadd.f32 %v44, %v171
  %173 = vmatmul.bf16.gmra.mxu0 %v124
  %v174 = vpop.f32.mrf.mxu0
  %v175 = vadd.f32 %v44, %v174
  %v176 = vpop.f32.mrf.mxu0
  %v177 = vadd.f32 %v44, %v176
  %178 = vdwg.mxu0
  %vm179 = vcmask 261120
  %v180 = vsel %vm179, %v140, 0.0
  %181 = vadd.xlane.f32.xlu0 %v180
  %v182 = vpop.xlane.xlu0 %181
  %v183 = vsel %vm179, %v142, 0.0
  %184 = vadd.xlane.f32.xlu0 %v183
  %v185 = vpop.xlane.xlu0 %184
  %v186 = vsel %vm179, %v145, 0.0
  %187 = vadd.xlane.f32.xlu0 %v186
  %v188 = vpop.xlane.xlu0 %187
  %v189 = vsel %vm179, %v147, 0.0
  %190 = vadd.xlane.f32.xlu0 %v189
  %v191 = vpop.xlane.xlu0 %190
  %v192 = vsel %vm179, %v150, 0.0
  %193 = vadd.xlane.f32.xlu0 %v192
  %v194 = vpop.xlane.xlu0 %193
  %v195 = vsel %vm179, %v152, 0.0
  %196 = vadd.xlane.f32.xlu0 %v195
  %v197 = vpop.xlane.xlu0 %196
  %v198 = vsel %vm179, %v155, 0.0
  %199 = vadd.xlane.f32.xlu0 %v198
  %v200 = vpop.xlane.xlu0 %199
  %v201 = vsel %vm179, %v157, 0.0
  %202 = vadd.xlane.f32.xlu0 %v201
  %v203 = vpop.xlane.xlu0 %202
  %v204 = vsel %vm179, %v160, 0.0
  %205 = vadd.xlane.f32.xlu0 %v204
  %v206 = vpop.xlane.xlu0 %205
  %v207 = vsel %vm179, %v162, 0.0
  %208 = vadd.xlane.f32.xlu0 %v207
  %v209 = vpop.xlane.xlu0 %208
  %v210 = vsel %vm179, %v165, 0.0
  %211 = vadd.xlane.f32.xlu0 %v210
  %v212 = vpop.xlane.xlu0 %211
  %v213 = vsel %vm179, %v167, 0.0
  %214 = vadd.xlane.f32.xlu0 %v213
  %v215 = vpop.xlane.xlu0 %214
  %v216 = vsel %vm179, %v170, 0.0
  %217 = vadd.xlane.f32.xlu0 %v216
  %v218 = vpop.xlane.xlu0 %217
  %v219 = vsel %vm179, %v172, 0.0
  %220 = vadd.xlane.f32.xlu0 %v219
  %v221 = vpop.xlane.xlu0 %220
  %v222 = vsel %vm179, %v175, 0.0
  %223 = vadd.xlane.f32.xlu0 %v222
  %v224 = vpop.xlane.xlu0 %223
  %v225 = vsel %vm179, %v177, 0.0
  %226 = vadd.xlane.f32.xlu0 %v225
  %v227 = vpop.xlane.xlu0 %226
  %v228 = vmul.f32 %v140, %v140
  %v229 = vmul.f32 %v142, %v142
  %v230 = vmul.f32 %v145, %v145
  %v231 = vmul.f32 %v147, %v147
  %v232 = vmul.f32 %v150, %v150
  %v233 = vmul.f32 %v152, %v152
  %v234 = vmul.f32 %v155, %v155
  %v235 = vmul.f32 %v157, %v157
  %v236 = vmul.f32 %v160, %v160
  %v237 = vmul.f32 %v162, %v162
  %v238 = vmul.f32 %v165, %v165
  %v239 = vmul.f32 %v167, %v167
  %v240 = vmul.f32 %v170, %v170
  %v241 = vmul.f32 %v172, %v172
  %v242 = vmul.f32 %v175, %v175
  %v243 = vmul.f32 %v177, %v177
  %v244 = vsel %vm179, %v228, 0.0
  %245 = vadd.xlane.f32.xlu0 %v244
  %v246 = vpop.xlane.xlu0 %245
  %v247 = vsel %vm179, %v229, 0.0
  %248 = vadd.xlane.f32.xlu0 %v247
  %v249 = vpop.xlane.xlu0 %248
  %v250 = vsel %vm179, %v230, 0.0
  %251 = vadd.xlane.f32.xlu0 %v250
  %v252 = vpop.xlane.xlu0 %251
  %v253 = vsel %vm179, %v231, 0.0
  %254 = vadd.xlane.f32.xlu0 %v253
  %v255 = vpop.xlane.xlu0 %254
  %v256 = vsel %vm179, %v232, 0.0
  %257 = vadd.xlane.f32.xlu0 %v256
  %v258 = vpop.xlane.xlu0 %257
  %v259 = vsel %vm179, %v233, 0.0
  %260 = vadd.xlane.f32.xlu0 %v259
  %v261 = vpop.xlane.xlu0 %260
  %v262 = vsel %vm179, %v234, 0.0
  %263 = vadd.xlane.f32.xlu0 %v262
  %v264 = vpop.xlane.xlu0 %263
  %v265 = vsel %vm179, %v235, 0.0
  %266 = vadd.xlane.f32.xlu0 %v265
  %v267 = vpop.xlane.xlu0 %266
  %v268 = vsel %vm179, %v236, 0.0
  %269 = vadd.xlane.f32.xlu0 %v268
  %v270 = vpop.xlane.xlu0 %269
  %v271 = vsel %vm179, %v237, 0.0
  %272 = vadd.xlane.f32.xlu0 %v271
  %v273 = vpop.xlane.xlu0 %272
  %v274 = vsel %vm179, %v238, 0.0
  %275 = vadd.xlane.f32.xlu0 %v274
  %v276 = vpop.xlane.xlu0 %275
  %v277 = vsel %vm179, %v239, 0.0
  %278 = vadd.xlane.f32.xlu0 %v277
  %v279 = vpop.xlane.xlu0 %278
  %v280 = vsel %vm179, %v240, 0.0
  %281 = vadd.xlane.f32.xlu0 %v280
  %v282 = vpop.xlane.xlu0 %281
  %v283 = vsel %vm179, %v241, 0.0
  %284 = vadd.xlane.f32.xlu0 %v283
  %v285 = vpop.xlane.xlu0 %284
  %v286 = vsel %vm179, %v242, 0.0
  %287 = vadd.xlane.f32.xlu0 %v286
  %v288 = vpop.xlane.xlu0 %287
  %v289 = vsel %vm179, %v243, 0.0
  %290 = vadd.xlane.f32.xlu0 %v289
  %v291 = vpop.xlane.xlu0 %290
  %v292 = vmul.f32 %v182, 0.03125
  %v293 = vmul.f32 %v185, 0.03125
  %v294 = vmul.f32 %v188, 0.03125
  %v295 = vmul.f32 %v191, 0.03125
  %v296 = vmul.f32 %v194, 0.03125
  %v297 = vmul.f32 %v197, 0.03125
  %v298 = vmul.f32 %v200, 0.03125
  %v299 = vmul.f32 %v203, 0.03125
  %v300 = vmul.f32 %v206, 0.03125
  %v301 = vmul.f32 %v209, 0.03125
  %v302 = vmul.f32 %v212, 0.03125
  %v303 = vmul.f32 %v215, 0.03125
  %v304 = vmul.f32 %v218, 0.03125
  %v305 = vmul.f32 %v221, 0.03125
  %v306 = vmul.f32 %v224, 0.03125
  %v307 = vmul.f32 %v227, 0.03125
  %v308 = vmul.f32 %v246, 0.03125
  %v309 = vmul.f32 %v249, 0.03125
  %v310 = vmul.f32 %v252, 0.03125
  %v311 = vmul.f32 %v255, 0.03125
  %v312 = vmul.f32 %v258, 0.03125
  %v313 = vmul.f32 %v261, 0.03125
  %v314 = vmul.f32 %v264, 0.03125
  %v315 = vmul.f32 %v267, 0.03125
  %v316 = vmul.f32 %v270, 0.03125
  %v317 = vmul.f32 %v273, 0.03125
  %v318 = vmul.f32 %v276, 0.03125
  %v319 = vmul.f32 %v279, 0.03125
  %v320 = vmul.f32 %v282, 0.03125
  %v321 = vmul.f32 %v285, 0.03125
  %v322 = vmul.f32 %v288, 0.03125
  %v323 = vmul.f32 %v291, 0.03125
  %v324 = vmul.f32 %v292, %v292
  %v325 = vmul.f32 %v293, %v293
  %v326 = vmul.f32 %v294, %v294
  %v327 = vmul.f32 %v295, %v295
  %v328 = vmul.f32 %v296, %v296
  %v329 = vmul.f32 %v297, %v297
  %v330 = vmul.f32 %v298, %v298
  %v331 = vmul.f32 %v299, %v299
  %v332 = vmul.f32 %v300, %v300
  %v333 = vmul.f32 %v301, %v301
  %v334 = vmul.f32 %v302, %v302
  %v335 = vmul.f32 %v303, %v303
  %v336 = vmul.f32 %v304, %v304
  %v337 = vmul.f32 %v305, %v305
  %v338 = vmul.f32 %v306, %v306
  %v339 = vmul.f32 %v307, %v307
  %v340 = vsub.f32 %v308, %v324
  %v341 = vsub.f32 %v309, %v325
  %v342 = vsub.f32 %v310, %v326
  %v343 = vsub.f32 %v311, %v327
  %v344 = vsub.f32 %v312, %v328
  %v345 = vsub.f32 %v313, %v329
  %v346 = vsub.f32 %v314, %v330
  %v347 = vsub.f32 %v315, %v331
  %v348 = vsub.f32 %v316, %v332
  %v349 = vsub.f32 %v317, %v333
  %v350 = vsub.f32 %v318, %v334
  %v351 = vsub.f32 %v319, %v335
  %v352 = vsub.f32 %v320, %v336
  %v353 = vsub.f32 %v321, %v337
  %v354 = vsub.f32 %v322, %v338
  %v355 = vsub.f32 %v323, %v339
  %v356 = vmax.f32 %v340, 0.0
  %v357 = vmax.f32 %v341, 0.0
  %v358 = vmax.f32 %v342, 0.0
  %v359 = vmax.f32 %v343, 0.0
  %v360 = vmax.f32 %v344, 0.0
  %v361 = vmax.f32 %v345, 0.0
  %v362 = vmax.f32 %v346, 0.0
  %v363 = vmax.f32 %v347, 0.0
  %v364 = vmax.f32 %v348, 0.0
  %v365 = vmax.f32 %v349, 0.0
  %v366 = vmax.f32 %v350, 0.0
  %v367 = vmax.f32 %v351, 0.0
  %v368 = vmax.f32 %v352, 0.0
  %v369 = vmax.f32 %v353, 0.0
  %v370 = vmax.f32 %v354, 0.0
  %v371 = vmax.f32 %v355, 0.0
  %v372 = vsub.f32 %v140, %v292
  %v373 = vsub.f32 %v142, %v293
  %v374 = vsub.f32 %v145, %v294
  %v375 = vsub.f32 %v147, %v295
  %v376 = vsub.f32 %v150, %v296
  %v377 = vsub.f32 %v152, %v297
  %v378 = vsub.f32 %v155, %v298
  %v379 = vsub.f32 %v157, %v299
  %v380 = vsub.f32 %v160, %v300
  %v381 = vsub.f32 %v162, %v301
  %v382 = vsub.f32 %v165, %v302
  %v383 = vsub.f32 %v167, %v303
  %v384 = vsub.f32 %v170, %v304
  %v385 = vsub.f32 %v172, %v305
  %v386 = vsub.f32 %v175, %v306
  %v387 = vsub.f32 %v177, %v307
  %v388 = vadd.f32 %v356, 1e-05
  %v389 = vadd.f32 %v357, 1e-05
  %v390 = vadd.f32 %v358, 1e-05
  %v391 = vadd.f32 %v359, 1e-05
  %v392 = vadd.f32 %v360, 1e-05
  %v393 = vadd.f32 %v361, 1e-05
  %v394 = vadd.f32 %v362, 1e-05
  %v395 = vadd.f32 %v363, 1e-05
  %v396 = vadd.f32 %v364, 1e-05
  %v397 = vadd.f32 %v365, 1e-05
  %v398 = vadd.f32 %v366, 1e-05
  %v399 = vadd.f32 %v367, 1e-05
  %v400 = vadd.f32 %v368, 1e-05
  %v401 = vadd.f32 %v369, 1e-05
  %v402 = vadd.f32 %v370, 1e-05
  %v403 = vadd.f32 %v371, 1e-05
  %v404 = vrsqrt.pop %v388
  %v405 = vmul.f32 %v404, %v388
  %v406 = vmul.f32 %v405, %v404
  %v407 = vmul.f32 0.5, %v406
  %v408 = vsub.f32 1.5, %v407
  %v409 = vmul.f32 %v404, %v408
  %vm410 = vweird.f32 %v388
  %vm411 = vweird.f32 %v404
  %vm412 = vmor %vm410, %vm411
  %v413 = vsel %vm412, %v404, %v409
  %v414 = vrsqrt.pop %v389
  %v415 = vmul.f32 %v414, %v389
  %v416 = vmul.f32 %v415, %v414
  %v417 = vmul.f32 0.5, %v416
  %v418 = vsub.f32 1.5, %v417
  %v419 = vmul.f32 %v414, %v418
  %vm420 = vweird.f32 %v389
  %vm421 = vweird.f32 %v414
  %vm422 = vmor %vm420, %vm421
  %v423 = vsel %vm422, %v414, %v419
  %v424 = vrsqrt.pop %v390
  %v425 = vmul.f32 %v424, %v390
  %v426 = vmul.f32 %v425, %v424
  %v427 = vmul.f32 0.5, %v426
  %v428 = vsub.f32 1.5, %v427
  %v429 = vmul.f32 %v424, %v428
  %vm430 = vweird.f32 %v390
  %vm431 = vweird.f32 %v424
  %vm432 = vmor %vm430, %vm431
  %v433 = vsel %vm432, %v424, %v429
  %v434 = vrsqrt.pop %v391
  %v435 = vmul.f32 %v434, %v391
  %v436 = vmul.f32 %v435, %v434
  %v437 = vmul.f32 0.5, %v436
  %v438 = vsub.f32 1.5, %v437
  %v439 = vmul.f32 %v434, %v438
  %vm440 = vweird.f32 %v391
  %vm441 = vweird.f32 %v434
  %vm442 = vmor %vm440, %vm441
  %v443 = vsel %vm442, %v434, %v439
  %v444 = vrsqrt.pop %v392
  %v445 = vmul.f32 %v444, %v392
  %v446 = vmul.f32 %v445, %v444
  %v447 = vmul.f32 0.5, %v446
  %v448 = vsub.f32 1.5, %v447
  %v449 = vmul.f32 %v444, %v448
  %vm450 = vweird.f32 %v392
  %vm451 = vweird.f32 %v444
  %vm452 = vmor %vm450, %vm451
  %v453 = vsel %vm452, %v444, %v449
  %v454 = vrsqrt.pop %v393
  %v455 = vmul.f32 %v454, %v393
  %v456 = vmul.f32 %v455, %v454
  %v457 = vmul.f32 0.5, %v456
  %v458 = vsub.f32 1.5, %v457
  %v459 = vmul.f32 %v454, %v458
  %vm460 = vweird.f32 %v393
  %vm461 = vweird.f32 %v454
  %vm462 = vmor %vm460, %vm461
  %v463 = vsel %vm462, %v454, %v459
  %v464 = vrsqrt.pop %v394
  %v465 = vmul.f32 %v464, %v394
  %v466 = vmul.f32 %v465, %v464
  %v467 = vmul.f32 0.5, %v466
  %v468 = vsub.f32 1.5, %v467
  %v469 = vmul.f32 %v464, %v468
  %vm470 = vweird.f32 %v394
  %vm471 = vweird.f32 %v464
  %vm472 = vmor %vm470, %vm471
  %v473 = vsel %vm472, %v464, %v469
  %v474 = vrsqrt.pop %v395
  %v475 = vmul.f32 %v474, %v395
  %v476 = vmul.f32 %v475, %v474
  %v477 = vmul.f32 0.5, %v476
  %v478 = vsub.f32 1.5, %v477
  %v479 = vmul.f32 %v474, %v478
  %vm480 = vweird.f32 %v395
  %vm481 = vweird.f32 %v474
  %vm482 = vmor %vm480, %vm481
  %v483 = vsel %vm482, %v474, %v479
  %v484 = vrsqrt.pop %v396
  %v485 = vmul.f32 %v484, %v396
  %v486 = vmul.f32 %v485, %v484
  %v487 = vmul.f32 0.5, %v486
  %v488 = vsub.f32 1.5, %v487
  %v489 = vmul.f32 %v484, %v488
  %vm490 = vweird.f32 %v396
  %vm491 = vweird.f32 %v484
  %vm492 = vmor %vm490, %vm491
  %v493 = vsel %vm492, %v484, %v489
  %v494 = vrsqrt.pop %v397
  %v495 = vmul.f32 %v494, %v397
  %v496 = vmul.f32 %v495, %v494
  %v497 = vmul.f32 0.5, %v496
  %v498 = vsub.f32 1.5, %v497
  %v499 = vmul.f32 %v494, %v498
  %vm500 = vweird.f32 %v397
  %vm501 = vweird.f32 %v494
  %vm502 = vmor %vm500, %vm501
  %v503 = vsel %vm502, %v494, %v499
  %v504 = vrsqrt.pop %v398
  %v505 = vmul.f32 %v504, %v398
  %v506 = vmul.f32 %v505, %v504
  %v507 = vmul.f32 0.5, %v506
  %v508 = vsub.f32 1.5, %v507
  %v509 = vmul.f32 %v504, %v508
  %vm510 = vweird.f32 %v398
  %vm511 = vweird.f32 %v504
  %vm512 = vmor %vm510, %vm511
  %v513 = vsel %vm512, %v504, %v509
  %v514 = vrsqrt.pop %v399
  %v515 = vmul.f32 %v514, %v399
  %v516 = vmul.f32 %v515, %v514
  %v517 = vmul.f32 0.5, %v516
  %v518 = vsub.f32 1.5, %v517
  %v519 = vmul.f32 %v514, %v518
  %vm520 = vweird.f32 %v399
  %vm521 = vweird.f32 %v514
  %vm522 = vmor %vm520, %vm521
  %v523 = vsel %vm522, %v514, %v519
  %v524 = vrsqrt.pop %v400
  %v525 = vmul.f32 %v524, %v400
  %v526 = vmul.f32 %v525, %v524
  %v527 = vmul.f32 0.5, %v526
  %v528 = vsub.f32 1.5, %v527
  %v529 = vmul.f32 %v524, %v528
  %vm530 = vweird.f32 %v400
  %vm531 = vweird.f32 %v524
  %vm532 = vmor %vm530, %vm531
  %v533 = vsel %vm532, %v524, %v529
  %v534 = vrsqrt.pop %v401
  %v535 = vmul.f32 %v534, %v401
  %v536 = vmul.f32 %v535, %v534
  %v537 = vmul.f32 0.5, %v536
  %v538 = vsub.f32 1.5, %v537
  %v539 = vmul.f32 %v534, %v538
  %vm540 = vweird.f32 %v401
  %vm541 = vweird.f32 %v534
  %vm542 = vmor %vm540, %vm541
  %v543 = vsel %vm542, %v534, %v539
  %v544 = vrsqrt.pop %v402
  %v545 = vmul.f32 %v544, %v402
  %v546 = vmul.f32 %v545, %v544
  %v547 = vmul.f32 0.5, %v546
  %v548 = vsub.f32 1.5, %v547
  %v549 = vmul.f32 %v544, %v548
  %vm550 = vweird.f32 %v402
  %vm551 = vweird.f32 %v544
  %vm552 = vmor %vm550, %vm551
  %v553 = vsel %vm552, %v544, %v549
  %v554 = vrsqrt.pop %v403
  %v555 = vmul.f32 %v554, %v403
  %v556 = vmul.f32 %v555, %v554
  %v557 = vmul.f32 0.5, %v556
  %v558 = vsub.f32 1.5, %v557
  %v559 = vmul.f32 %v554, %v558
  %vm560 = vweird.f32 %v403
  %vm561 = vweird.f32 %v554
  %vm562 = vmor %vm560, %vm561
  %v563 = vsel %vm562, %v554, %v559
  %v564 = vmul.f32 %v372, %v413
  %v565 = vmul.f32 %v373, %v423
  %v566 = vmul.f32 %v374, %v433
  %v567 = vmul.f32 %v375, %v443
  %v568 = vmul.f32 %v376, %v453
  %v569 = vmul.f32 %v377, %v463
  %v570 = vmul.f32 %v378, %v473
  %v571 = vmul.f32 %v379, %v483
  %v572 = vmul.f32 %v380, %v493
  %v573 = vmul.f32 %v381, %v503
  %v574 = vmul.f32 %v382, %v513
  %v575 = vmul.f32 %v383, %v523
  %v576 = vmul.f32 %v384, %v533
  %v577 = vmul.f32 %v385, %v543
  %v578 = vmul.f32 %v386, %v553
  %v579 = vmul.f32 %v387, %v563
  %v580 = vld [vmem:[%s3] sm:$0x1]
  %v582 = vperm.slane %v580, 0
  %v584 = vmul.f32 %v564, %v582
  %v585 = vmul.f32 %v565, %v582
  %v586 = vmul.f32 %v566, %v582
  %v587 = vmul.f32 %v567, %v582
  %v588 = vmul.f32 %v568, %v582
  %v589 = vmul.f32 %v569, %v582
  %v590 = vmul.f32 %v570, %v582
  %v591 = vmul.f32 %v571, %v582
  %v592 = vmul.f32 %v572, %v582
  %v593 = vmul.f32 %v573, %v582
  %v594 = vmul.f32 %v574, %v582
  %v595 = vmul.f32 %v575, %v582
  %v596 = vmul.f32 %v576, %v582
  %v597 = vmul.f32 %v577, %v582
  %v598 = vmul.f32 %v578, %v582
  %v599 = vmul.f32 %v579, %v582
  %v600 = vld [vmem:[%s4] sm:$0x1]
  %v602 = vperm.slane %v600, 0
  %v604 = vadd.f32 %v584, %v602
  %v605 = vadd.f32 %v585, %v602
  %v606 = vadd.f32 %v586, %v602
  %v607 = vadd.f32 %v587, %v602
  %v608 = vadd.f32 %v588, %v602
  %v609 = vadd.f32 %v589, %v602
  %v610 = vadd.f32 %v590, %v602
  %v611 = vadd.f32 %v591, %v602
  %v612 = vadd.f32 %v592, %v602
  %v613 = vadd.f32 %v593, %v602
  %v614 = vadd.f32 %v594, %v602
  %v615 = vadd.f32 %v595, %v602
  %v616 = vadd.f32 %v596, %v602
  %v617 = vadd.f32 %v597, %v602
  %v618 = vadd.f32 %v598, %v602
  %v619 = vadd.f32 %v599, %v602
  %620 = vxpose.xlu0.b32.start [1/16] %v604, 128
  %621 = vxpose.xlu0.b32.cont [2/16] %v605, 128
  %622 = vxpose.xlu0.b32.cont [3/16] %v606, 128
  %623 = vxpose.xlu0.b32.cont [4/16] %v607, 128
  %624 = vxpose.xlu0.b32.cont [5/16] %v608, 128
  %625 = vxpose.xlu0.b32.cont [6/16] %v609, 128
  %626 = vxpose.xlu0.b32.cont [7/16] %v610, 128
  %627 = vxpose.xlu0.b32.cont [8/16] %v611, 128
  %628 = vxpose.xlu0.b32.cont [9/16] %v612, 128
  %629 = vxpose.xlu0.b32.cont [10/16] %v613, 128
  %630 = vxpose.xlu0.b32.cont [11/16] %v614, 128
  %631 = vxpose.xlu0.b32.cont [12/16] %v615, 128
  %632 = vxpose.xlu0.b32.cont [13/16] %v616, 128
  %633 = vxpose.xlu0.b32.cont [14/16] %v617, 128
  %634 = vxpose.xlu0.b32.cont [15/16] %v618, 128
  %635 = vxpose.xlu0.b32.end [16/16] %v619, 128
  %v636 = vpop.trf.xlu0
  %v637 = vpop.trf.xlu0
  %v638 = vpop.trf.xlu0
  %v639 = vpop.trf.xlu0
  %v640 = vpop.trf.xlu0
  %v641 = vpop.trf.xlu0
  %v642 = vpop.trf.xlu0
  %v643 = vpop.trf.xlu0
  %v644 = vpop.trf.xlu0
  %v645 = vpop.trf.xlu0
  %v646 = vpop.trf.xlu0
  %v647 = vpop.trf.xlu0
  %v648 = vpop.trf.xlu0
  %v649 = vpop.trf.xlu0
  %v650 = vpop.trf.xlu0
  %v651 = vpop.trf.xlu0
  %652 = vst [vmem:[%s5] sm:$0xff] %v636
  %653 = vst [vmem:[%s5 + $0x8] sm:$0xff] %v637
  %654 = vst [vmem:[%s5 + $0x10] sm:$0xff] %v638
  %655 = vst [vmem:[%s5 + $0x18] sm:$0xff] %v639
  // Predicated region
  $region22: #{overlap_patch_embed.1} parent=0 // pred_check
    _
  $region23: #{overlap_patch_embed.1} parent=0 // pred_check_branch
    %657 = sbr.rel (0) target = $region25
  $region24: #{overlap_patch_embed.1} parent=0 // pred_region
    _
  $region25: #{overlap_patch_embed.1} parent=0 // pred_fallthru
    _
  // Predicated region
  $region26: #{overlap_patch_embed.1} parent=0 // pred_check
    _
  $region27: #{overlap_patch_embed.1} parent=0 // pred_check_branch
    %659 = sbr.rel (0) target = $region29
  $region28: #{overlap_patch_embed.1} parent=0 // pred_region
    _
  $region29: #{overlap_patch_embed.1} parent=0 // pred_fallthru
    _

</llo_original>
